<compile_context>
chip_gen: v7x
topology: tpu7x:2x2x1
jax: 0.10.0
libtpu: 0.0.40
codegen_flags: <defaults>
</compile_context>

<pallas_src>
import functools

import jax
import jax.numpy as jnp
from jax.experimental import pallas as pl
from jax.experimental.pallas import tpu as pltpu


def mlp_kernel(x_ref, w1_ref, w2_ref, w3_ref, o_ref):
    # x_ref : (3, TB)  f32  rows = [x0, x1, 1]       (ones row feeds the folded biases)
    # w1_ref: (17, 3)  f32  rows 0..15 = [W1 | b1], row 16 = [0, 0, 1]  (ones passthrough)
    # w2_ref: (33, 17) bf16 rows 0..31 = [W2 | b2], row 32 = e_16       (ones passthrough)
    # w3_ref: (3, 33)  bf16 [W3 | b3]
    h1 = jnp.dot(w1_ref[...], x_ref[...], preferred_element_type=jnp.float32)  # (17, TB)
    h1 = jnp.maximum(h1, 0.0).astype(jnp.bfloat16)       # row 16 stays exactly 1.0

    h2 = jnp.dot(w2_ref[...], h1, preferred_element_type=jnp.float32)          # (33, TB)
    h2 = jnp.maximum(h2, 0.0).astype(jnp.bfloat16)       # row 32 stays exactly 1.0

    out = jnp.dot(w3_ref[...], h2, preferred_element_type=jnp.float32)         # (3, TB)
    o_ref[...] = out.astype(o_ref.dtype)                 # lane-dense (3, TB) store


def _augmented_weights(params):
    """Fold every bias into its weight matrix (MXU does the bias add for free)."""
    w1 = params["w1"].astype(jnp.float32)   # (16, 2)
    b1 = params["b1"].astype(jnp.float32)   # (16, 1)
    w2 = params["w2"].astype(jnp.float32)   # (32, 16)
    b2 = params["b2"].astype(jnp.float32)   # (32, 1)
    w3 = params["w3"].astype(jnp.float32)   # (3, 32)
    b3 = params["b3"].astype(jnp.float32)   # (3, 1)

    ones_pass1 = jnp.array([[0.0, 0.0, 1.0]], jnp.float32)                 # keeps ones row alive
    w1a = jnp.concatenate(
        [jnp.concatenate([w1, b1], axis=1), ones_pass1], axis=0)           # (17, 3)  f32

    ones_pass2 = jax.nn.one_hot(jnp.array([16]), 17, dtype=jnp.float32)    # (1, 17)
    w2a = jnp.concatenate(
        [jnp.concatenate([w2, b2], axis=1), ones_pass2], axis=0
    ).astype(jnp.bfloat16)                                                 # (33, 17) bf16

    w3a = jnp.concatenate([w3, b3], axis=1).astype(jnp.bfloat16)           # (3, 33)  bf16
    return w1a, w2a, w3a


def _tile_and_pad(batch, tile_b):
    """128-align the lane tile, cap it to the batch, aim for >=2 grid steps (v7x)."""
    tile_b = ((max(128, int(tile_b)) + 127) // 128) * 128
    b128 = ((batch + 127) // 128) * 128
    tile_b = min(tile_b, b128)
    if b128 >= 256 and tile_b > b128 // 2:
        tile_b = max(128, ((b128 // 2) // 128) * 128)
    b_pad = ((batch + tile_b - 1) // tile_b) * tile_b
    return tile_b, b_pad


@functools.partial(jax.jit, static_argnames=("tile_b",))
def model_v0_forward(x, params, tile_b=8192):
    """Full MLP forward pass in one batch-tiled Pallas kernel.

    x: (B, 2) float32
    params: PyTorch nn.Linear layout: w1 (16,2), b1 (16,1), w2 (32,16), b2 (32,1),
            w3 (3,32), b3 (3,1)
    returns: (B, 3) float32 logits
    """
    B = x.shape[0]
    tile_b, b_pad = _tile_and_pad(B, tile_b)

    # Feature-major layout + constant-ones row; pad/transpose/concat fuse inside this jit
    # (no standalone HBM transpose pass for the input or the output).
    xa = jnp.concatenate(
        [x.astype(jnp.float32).T, jnp.ones((1, B), jnp.float32)], axis=0)  # (3, B)
    xa = jnp.pad(xa, ((0, 0), (0, b_pad - B)))                             # (3, b_pad)

    w1a, w2a, w3a = _augmented_weights(params)

    out_t = pl.pallas_call(
        mlp_kernel,
        out_shape=jax.ShapeDtypeStruct((3, b_pad), jnp.float32),
        grid_spec=pltpu.PrefetchScalarGridSpec(
            num_scalar_prefetch=0,
            grid=(b_pad // tile_b,),
            in_specs=[
                pl.BlockSpec((3, tile_b), lambda i: (0, i)),   # x tile (pipelined)
                pl.BlockSpec((17, 3), lambda i: (0, 0)),       # W1a (VMEM-resident)
                pl.BlockSpec((33, 17), lambda i: (0, 0)),      # W2a (VMEM-resident)
                pl.BlockSpec((3, 33), lambda i: (0, 0)),       # W3a (VMEM-resident)
            ],
            out_specs=pl.BlockSpec((3, tile_b), lambda i: (0, i)),
        ),
        compiler_params=pltpu.CompilerParams(
            dimension_semantics=("parallel",),   # shard batch grid across TCs on v7x
        ),
    )(xa, w1a, w2a, w3a)

    # Drop padded columns and return batch-major; the transpose fuses with consumers.
    return out_t[:, :B].T


def init_params(key):
    """Deterministic init mirroring PyTorch nn.Linear default
    (uniform in [-1/sqrt(fan_in), 1/sqrt(fan_in)]), weights stored as (out, in)."""
    dims = [(2, 16), (16, 32), (32, 3)]
    params = {}
    for i, (fan_in, fan_out) in enumerate(dims, start=1):
        key, kw, kb = jax.random.split(key, 3)
        bound = 1.0 / jnp.sqrt(float(fan_in))
        params[f"w{i}"] = jax.random.uniform(
            kw, (fan_out, fan_in), jnp.float32, minval=-bound, maxval=bound
        )
        params[f"b{i}"] = jax.random.uniform(
            kb, (fan_out, 1), jnp.float32, minval=-bound, maxval=bound
        )
    return params


def reference_forward(x, params):
    h1 = jnp.maximum(x @ params["w1"].T + params["b1"].T, 0.0)
    h2 = jnp.maximum(h1 @ params["w2"].T + params["b2"].T, 0.0)
    return h2 @ params["w3"].T + params["b3"].T


if __name__ == "__main__":
    key = jax.random.PRNGKey(0)
    key, kx = jax.random.split(key)
    params = init_params(key)

    # Small batch (pads to one 128-lane tile internally).
    B = 8
    x = jax.random.normal(kx, (B, 2), dtype=jnp.float32)
    out = jax.block_until_ready(model_v0_forward(x, params))
    ref = reference_forward(x, params)
    assert out.shape == (B, 3)
    # bf16 MXU operands on layers 2/3 (f32 accumulate) -> loosened tolerance vs f32 ref.
    assert jnp.allclose(out, ref, atol=5e-2, rtol=5e-2), float(
        jnp.max(jnp.abs(out - ref))
    )

    # Larger batch exercises the multi-step grid (>=2 steps so v7x can use both TCs).
    key, kx2 = jax.random.split(key)
    x_big = jax.random.normal(kx2, (1024, 2), dtype=jnp.float32)
    out_big = jax.block_until_ready(model_v0_forward(x_big, params))
    ref_big = reference_forward(x_big, params)
    assert out_big.shape == (1024, 3)
    assert jnp.allclose(out_big, ref_big, atol=5e-2, rtol=5e-2), float(
        jnp.max(jnp.abs(out_big - ref_big))
    )

    print("KERNEL_OK")
</pallas_src>

<mosaic_0001>
module attributes {stable_mosaic.version = 11 : i64} {
  func.func @mlp_kernel(%arg0: i32, %arg1: memref<3x128xf32, #tpu.memory_space<vmem>>, %arg2: memref<17x3xf32, #tpu.memory_space<vmem>>, %arg3: memref<33x17xbf16, #tpu.memory_space<vmem>>, %arg4: memref<3x33xbf16, #tpu.memory_space<vmem>>, %arg5: memref<3x128xf32, #tpu.memory_space<vmem>>) attributes {dimension_semantics = [#tpu.dimension_semantics<parallel>], iteration_bounds = array<i64: 1>, scalar_prefetch = 0 : i64, scratch_operands = 0 : i64, tpu.core_type = #tpu.core_type<tc>, window_params = [{transform_indices = @transform_0, window_bounds = array<i64: 3, 128>}, {pipeline_mode = #tpu.pipeline_mode<synchronous>, transform_indices = @transform_1, window_bounds = array<i64: 17, 3>}, {pipeline_mode = #tpu.pipeline_mode<synchronous>, transform_indices = @transform_2, window_bounds = array<i64: 33, 17>}, {pipeline_mode = #tpu.pipeline_mode<synchronous>, transform_indices = @transform_3, window_bounds = array<i64: 3, 33>}, {transform_indices = @transform_4, window_bounds = array<i64: 3, 128>}]} {
    %c0 = arith.constant 0 : index
    %c0_0 = arith.constant 0 : index
    %0 = vector.load %arg2[%c0, %c0_0] : memref<17x3xf32, #tpu.memory_space<vmem>>, vector<17x3xf32>
    %c0_1 = arith.constant 0 : index
    %c0_2 = arith.constant 0 : index
    %1 = vector.load %arg1[%c0_1, %c0_2] : memref<3x128xf32, #tpu.memory_space<vmem>>, vector<3x128xf32>
    %cst = arith.constant dense<0.000000e+00> : vector<17x128xf32>
    %2 = tpu.matmul %0, %1, %cst {dimension_numbers = #tpu.dot_dimension_numbers<[1], [0], [0], [1], [0, 0, 1, 1], [], []>} : vector<17x3xf32>, vector<3x128xf32>, vector<17x128xf32> -> vector<17x128xf32>
    %cst_3 = arith.constant 0.000000e+00 : f32
    %3 = vector.broadcast %cst_3 : f32 to vector<17x128xf32>
    %4 = arith.maximumf %2, %3 : vector<17x128xf32>
    %5 = arith.truncf %4 : vector<17x128xf32> to vector<17x128xbf16>
    %c0_4 = arith.constant 0 : index
    %c0_5 = arith.constant 0 : index
    %6 = vector.load %arg3[%c0_4, %c0_5] : memref<33x17xbf16, #tpu.memory_space<vmem>>, vector<33x17xbf16>
    %cst_6 = arith.constant dense<0.000000e+00> : vector<33x128xf32>
    %7 = tpu.matmul %6, %5, %cst_6 {dimension_numbers = #tpu.dot_dimension_numbers<[1], [0], [0], [1], [0, 0, 1, 1], [], []>} : vector<33x17xbf16>, vector<17x128xbf16>, vector<33x128xf32> -> vector<33x128xf32>
    %cst_7 = arith.constant 0.000000e+00 : f32
    %8 = vector.broadcast %cst_7 : f32 to vector<33x128xf32>
    %9 = arith.maximumf %7, %8 : vector<33x128xf32>
    %10 = arith.truncf %9 : vector<33x128xf32> to vector<33x128xbf16>
    %c0_8 = arith.constant 0 : index
    %c0_9 = arith.constant 0 : index
    %11 = vector.load %arg4[%c0_8, %c0_9] : memref<3x33xbf16, #tpu.memory_space<vmem>>, vector<3x33xbf16>
    %cst_10 = arith.constant dense<0.000000e+00> : vector<3x128xf32>
    %12 = tpu.matmul %11, %10, %cst_10 {dimension_numbers = #tpu.dot_dimension_numbers<[1], [0], [0], [1], [0, 0, 1, 1], [], []>} : vector<3x33xbf16>, vector<33x128xbf16>, vector<3x128xf32> -> vector<3x128xf32>
    %c0_11 = arith.constant 0 : index
    %c0_12 = arith.constant 0 : index
    %13 = vector.load %arg5[%c0_11, %c0_12] : memref<3x128xf32, #tpu.memory_space<vmem>>, vector<3x128xf32>
    tpu.vector_store %arg5[%c0_11, %c0_12], %12 {strides = array<i32>} : memref<3x128xf32, #tpu.memory_space<vmem>>, vector<3x128xf32>,
    return
  }
  func.func @transform_0(%arg0: i32) -> (i32, i32) {
    %c0_i32 = arith.constant 0 : i32
    %c0_i32_0 = arith.constant 0 : i32
    return %c0_i32, %arg0 : i32, i32
  }
  func.func @transform_1(%arg0: i32) -> (i32, i32) {
    %c0_i32 = arith.constant 0 : i32
    %c0_i32_0 = arith.constant 0 : i32
    %c0_i32_1 = arith.constant 0 : i32
    return %c0_i32, %c0_i32_0 : i32, i32
  }
  func.func @transform_2(%arg0: i32) -> (i32, i32) {
    %c0_i32 = arith.constant 0 : i32
    %c0_i32_0 = arith.constant 0 : i32
    %c0_i32_1 = arith.constant 0 : i32
    return %c0_i32, %c0_i32_0 : i32, i32
  }
  func.func @transform_3(%arg0: i32) -> (i32, i32) {
    %c0_i32 = arith.constant 0 : i32
    %c0_i32_0 = arith.constant 0 : i32
    %c0_i32_1 = arith.constant 0 : i32
    return %c0_i32, %c0_i32_0 : i32, i32
  }
  func.func @transform_4(%arg0: i32) -> (i32, i32) {
    %c0_i32 = arith.constant 0 : i32
    %c0_i32_0 = arith.constant 0 : i32
    return %c0_i32, %arg0 : i32, i32
  }
}

</mosaic_0001>

<llo_original>
// kernel: model_v0_forward.1
$region0: #{model_v0_forward.1}
  #allocation0 [shape = 'u32[]', space=smem, size = 0x4, offset = 0x4, fixed_abs, tag = 'smem constant byte address 0x4 - core index']
  #allocation1 [shape = 'u32[144,128]{1,0:T(1,128)}', space=vmem, size = 0x12000, scoped, tag = 'internal scratch']
  %s0 = inlined_call_operand.vmem [shape: f32[3,128], index: 0, kind: input, shape index: {}]
  %s1 = inlined_call_operand.vmem [shape: f32[17,3], index: 1, kind: input, shape index: {}]
  %s2 = inlined_call_operand.vmem [shape: bf16[33,17], index: 2, kind: input, shape index: {}]
  %s3 = inlined_call_operand.vmem [shape: bf16[3,33], index: 3, kind: input, shape index: {}]
  %s4 = inlined_call_operand.vmem [shape: f32[3,128], index: 4, kind: output, shape index: {}]
  %s5 = sld [smem:[#allocation0]]
  $region26: #{model_v0_forward.1} parent=0
    _
  %s7 = ssub.s32 1, %s5
  %s8 = scalar_select 0, %s7, %s5
  // Predicated region
  $region2: #{model_v0_forward.1} parent=0 // pred_check
    _
  $region3: #{model_v0_forward.1} parent=0 // pred_check_branch
    %10 = sbr.rel (0) target = $region5
  $region4: #{model_v0_forward.1} parent=0 // pred_region
    _
  $region5: #{model_v0_forward.1} parent=0 // pred_fallthru
    _
  // Predicated region
  $region6: #{model_v0_forward.1} parent=0 // pred_check
    _
  $region7: #{model_v0_forward.1} parent=0 // pred_check_branch
    %12 = sbr.rel (0) target = $region9
  $region8: #{model_v0_forward.1} parent=0 // pred_region
    _
  $region9: #{model_v0_forward.1} parent=0 // pred_fallthru
    _
  // Predicated region
  $region10: #{model_v0_forward.1} parent=0 // pred_check
    _
  $region11: #{model_v0_forward.1} parent=0 // pred_check_branch
    %14 = sbr.rel (0) target = $region13
  $region12: #{model_v0_forward.1} parent=0 // pred_region
    _
  $region13: #{model_v0_forward.1} parent=0 // pred_fallthru
    _
  // Predicated region
  $region14: #{model_v0_forward.1} parent=0 // pred_check
    _
  $region15: #{model_v0_forward.1} parent=0 // pred_check_branch
    %16 = sbr.rel (0) target = $region17
  $region16: #{model_v0_forward.1} parent=0 // pred_region
    _
  $region17: #{model_v0_forward.1} parent=0 // pred_fallthru
    _
  %v18 = vld [vmem:[%s1] sm:$0xff]
  %v19 = vld [vmem:[%s1 + $0x8] sm:$0xff]
  %v20 = vld [vmem:[%s1 + $0x10] sm:$0x1]
  %v21 = vld [vmem:[%s0] sm:$0x7]
  %vm22 = vcmask 23552
  %v24 = vsel %vm22, %v18, 0
  %v27 = vsel %vm22, %v19, 0
  %v30 = vsel %vm22, %v20, 0
  %vm32 = vcmask 1042432
  %v34 = vsel %vm32, %v21, 0
  %36 = vmatprep.subr.mxu0 0.0
  %37 = vmatpush1.msra.mxu0 %v34
  %38 = vmatprep.subr.mxu0 0.0
  %39 = vmatpush1.msra.mxu0 0.0
  %40 = vmatprep.subr.mxu0 0.0
  %41 = vmatpush1.msra.mxu0 0.0
  %42 = vmatprep.subr.mxu0 0.0
  %43 = vmatpush1.msra.mxu0 0.0
  %44 = vmatprep.subr.mxu0 0.0
  %45 = vmatpush1.msra.mxu0 0.0
  %46 = vmatprep.subr.mxu0 0.0
  %47 = vmatpush1.msra.mxu0 0.0
  %48 = vmatprep.subr.mxu0 0.0
  %49 = vmatpush1.msra.mxu0 0.0
  %50 = vmatprep.subr.mxu0 0.0
  %51 = vmatpush1.msra.mxu0 0.0
  %52 = vmatprep.subr.mxu0 0.0
  %53 = vmatpush1.msra.mxu0 0.0
  %54 = vmatprep.subr.mxu0 0.0
  %55 = vmatpush1.msra.mxu0 0.0
  %56 = vmatprep.subr.mxu0 0.0
  %57 = vmatpush1.msra.mxu0 0.0
  %58 = vmatprep.subr.mxu0 0.0
  %59 = vmatpush1.msra.mxu0 0.0
  %60 = vmatprep.subr.mxu0 0.0
  %61 = vmatpush1.msra.mxu0 0.0
  %62 = vmatprep.subr.mxu0 0.0
  %63 = vmatpush1.msra.mxu0 0.0
  %64 = vmatprep.subr.mxu0 0.0
  %65 = vmatpush1.msra.mxu0 0.0
  %66 = vmatprep.subr.mxu0 0.0
  %67 = vmatpush1.msra.mxu0 0.0
  %68 = vmatprep.subr.mxu0 0.0
  %69 = vmatpush1.msra.mxu0 0.0
  %70 = vmatprep.subr.mxu0 0.0
  %71 = vmatpush1.msra.mxu0 0.0
  %72 = vmatprep.subr.mxu0 0.0
  %73 = vmatpush1.msra.mxu0 0.0
  %74 = vmatprep.subr.mxu0 0.0
  %75 = vmatpush1.msra.mxu0 0.0
  %76 = vmatprep.subr.mxu0 0.0
  %77 = vmatpush1.msra.mxu0 0.0
  %78 = vmatprep.subr.mxu0 0.0
  %79 = vmatpush1.msra.mxu0 0.0
  %80 = vmatprep.subr.mxu0 0.0
  %81 = vmatpush1.msra.mxu0 0.0
  %82 = vmatprep.subr.mxu0 0.0
  %83 = vmatpush1.msra.mxu0 0.0
  %84 = vmatprep.subr.mxu0 0.0
  %85 = vmatpush1.msra.mxu0 0.0
  %86 = vmatprep.subr.mxu0 0.0
  %87 = vmatpush1.msra.mxu0 0.0
  %88 = vmatprep.subr.mxu0 0.0
  %89 = vmatpush1.msra.mxu0 0.0
  %90 = vmatprep.subr.mxu0 0.0
  %91 = vmatpush1.msra.mxu0 0.0
  %92 = vmatprep.subr.mxu0 0.0
  %93 = vmatpush1.msra.mxu0 0.0
  %94 = vmatprep.subr.mxu0 0.0
  %95 = vmatpush1.msra.mxu0 0.0
  %96 = vmatprep.subr.mxu0 0.0
  %97 = vmatpush1.msra.mxu0 0.0
  %98 = vmatprep.subr.mxu0 0.0
  %99 = vmatpush1.msra.mxu0 0.0
  %100 = vmatprep.mubr.f32.mxu0 0.0
  %101 = vmatmul.mubr.f32.gmra.mrb[0].mxu0 %v24
  %v102 = vpop.f32.mrb[0].mxu0
  %v103 = vadd.f32 0.0, %v102
  %v104 = vpop.f32.mrb[0].mxu0
  %105 = vmatprep.mubr.f32.mxu0 0.0
  %106 = vmatmul.mubr.f32.gmra.mrb[0].mxu0 %v27
  %v107 = vpop.f32.mrb[0].mxu0
  %v108 = vadd.f32 0.0, %v107
  %v109 = vpop.f32.mrb[0].mxu0
  %110 = vmatprep.mubr.f32.mxu0 0.0
  %111 = vmatmul.mubr.f32.gmra.mrb[0].mxu0 %v30
  %v112 = vpop.f32.mrb[0].mxu0
  %v113 = vadd.f32 0.0, %v112
  %v114 = vpop.f32.mrb[0].mxu0
  %115 = vdwg.mxu0
  %v116 = vmax.f32 %v103, 0.0
  %v117 = vmax.f32 %v108, 0.0
  %v118 = vmax.f32 %v113, 0.0
  %v119 = vpack.c.bf16 %v117, %v116
  %v120 = vpack.c.bf16 %v118, %v118
  %v121 = vld [vmem:[%s2] sm:$0xf]
  %v122 = vld [vmem:[%s2 + $0x4] sm:$0xf]
  %v123 = vld [vmem:[%s2 + $0x8] sm:$0xf]
  %v124 = vld [vmem:[%s2 + $0xc] sm:$0xf]
  %v125 = vld [vmem:[%s2 + $0x10] sm:$0x1]
  %v131 = vunpack.c.l.b16 %v121
  %v132 = vunpack.c.l.b16 %v122
  %v133 = vunpack.c.l.b16 %v123
  %v134 = vunpack.c.l.b16 %v124
  %v135 = vunpack.c.l.b16 %v125
  %v136 = vpack.c.b16 %v132, %v131
  %v137 = vpack.c.b16 %v134, %v133
  %v138 = vpack.c.b16 %v135, %v135
  %vm139 = vcmask 138240
  %v141 = vsel %vm139, %v136, 0
  %v144 = vsel %vm139, %v137, 0
  %v147 = vsel %vm139, %v138, 0
  %vm149 = vcmask 1040384
  %v150 = vsel 0, 4294967295, 65535
  %v151 = vsel %vm149, %v150, 0
  %v153 = vand.u32 %v120, %v151
  %155 = vmatprep.subr.bf16.mxu0 0
  %156 = vmatpush1.bf16.msra.mxu0 %v119
  %157 = vmatprep.subr.bf16.mxu0 0
  %158 = vmatpush1.bf16.msra.mxu0 %v153
  %159 = vmatprep.subr.bf16.mxu0 0
  %160 = vmatpush1.bf16.msra.mxu0 0
  %161 = vmatprep.subr.bf16.mxu0 0
  %162 = vmatpush1.bf16.msra.mxu0 0
  %163 = vmatprep.subr.bf16.mxu0 0
  %164 = vmatpush1.bf16.msra.mxu0 0
  %165 = vmatprep.subr.bf16.mxu0 0
  %166 = vmatpush1.bf16.msra.mxu0 0
  %167 = vmatprep.subr.bf16.mxu0 0
  %168 = vmatpush1.bf16.msra.mxu0 0
  %169 = vmatprep.subr.bf16.mxu0 0
  %170 = vmatpush1.bf16.msra.mxu0 0
  %171 = vmatprep.subr.bf16.mxu0 0
  %172 = vmatpush1.bf16.msra.mxu0 0
  %173 = vmatprep.subr.bf16.mxu0 0
  %174 = vmatpush1.bf16.msra.mxu0 0
  %175 = vmatprep.subr.bf16.mxu0 0
  %176 = vmatpush1.bf16.msra.mxu0 0
  %177 = vmatprep.subr.bf16.mxu0 0
  %178 = vmatpush1.bf16.msra.mxu0 0
  %179 = vmatprep.subr.bf16.mxu0 0
  %180 = vmatpush1.bf16.msra.mxu0 0
  %181 = vmatprep.subr.bf16.mxu0 0
  %182 = vmatpush1.bf16.msra.mxu0 0
  %183 = vmatprep.subr.bf16.mxu0 0
  %184 = vmatpush1.bf16.msra.mxu0 0
  %185 = vmatprep.subr.bf16.mxu0 0
  %186 = vmatpush1.bf16.msra.mxu0 0
  %187 = vmatprep.mubr.bf16.mxu0 0
  %188 = vmatmul.mubr.bf16.gmra.mrb[0].mxu0 %v141
  %v189 = vpop.f32.mrb[0].mxu0
  %v190 = vadd.f32 0.0, %v189
  %v191 = vpop.f32.mrb[0].mxu0
  %v192 = vpop.f32.mrb[0].mxu0
  %v193 = vadd.f32 0.0, %v192
  %v194 = vpop.f32.mrb[0].mxu0
  %195 = vmatprep.mubr.bf16.mxu0 0
  %196 = vmatmul.mubr.bf16.gmra.mrb[0].mxu0 %v144
  %v197 = vpop.f32.mrb[0].mxu0
  %v198 = vadd.f32 0.0, %v197
  %v199 = vpop.f32.mrb[0].mxu0
  %v200 = vpop.f32.mrb[0].mxu0
  %v201 = vadd.f32 0.0, %v200
  %v202 = vpop.f32.mrb[0].mxu0
  %203 = vmatprep.mubr.bf16.mxu0 0
  %204 = vmatmul.mubr.bf16.gmra.mrb[0].mxu0 %v147
  %v205 = vpop.f32.mrb[0].mxu0
  %v206 = vadd.f32 0.0, %v205
  %v207 = vpop.f32.mrb[0].mxu0
  %v208 = vpop.f32.mrb[0].mxu0
  %v209 = vpop.f32.mrb[0].mxu0
  %210 = vdwg.mxu0
  %v211 = vmax.f32 %v190, 0.0
  %v212 = vmax.f32 %v193, 0.0
  %v213 = vmax.f32 %v198, 0.0
  %v214 = vmax.f32 %v201, 0.0
  %v215 = vmax.f32 %v206, 0.0
  %v216 = vpack.c.bf16 %v212, %v211
  %v217 = vpack.c.bf16 %v214, %v213
  %v218 = vpack.c.bf16 %v215, %v215
  %v219 = vld [vmem:[%s3] sm:$0x3]
  %vm220 = vcmask 269312
  %v222 = vsel %vm220, %v219, 0
  %v225 = vand.u32 %v218, %v151
  %227 = vmatprep.subr.bf16.mxu0 0
  %228 = vmatpush1.bf16.msra.mxu0 %v216
  %229 = vmatprep.subr.bf16.mxu0 0
  %230 = vmatpush1.bf16.msra.mxu0 %v217
  %231 = vmatprep.subr.bf16.mxu0 0
  %232 = vmatpush1.bf16.msra.mxu0 %v225
  %233 = vmatprep.subr.bf16.mxu0 0
  %234 = vmatpush1.bf16.msra.mxu0 0
  %235 = vmatprep.subr.bf16.mxu0 0
  %236 = vmatpush1.bf16.msra.mxu0 0
  %237 = vmatprep.subr.bf16.mxu0 0
  %238 = vmatpush1.bf16.msra.mxu0 0
  %239 = vmatprep.subr.bf16.mxu0 0
  %240 = vmatpush1.bf16.msra.mxu0 0
  %241 = vmatprep.subr.bf16.mxu0 0
  %242 = vmatpush1.bf16.msra.mxu0 0
  %243 = vmatprep.subr.bf16.mxu0 0
  %244 = vmatpush1.bf16.msra.mxu0 0
  %245 = vmatprep.subr.bf16.mxu0 0
  %246 = vmatpush1.bf16.msra.mxu0 0
  %247 = vmatprep.subr.bf16.mxu0 0
  %248 = vmatpush1.bf16.msra.mxu0 0
  %249 = vmatprep.subr.bf16.mxu0 0
  %250 = vmatpush1.bf16.msra.mxu0 0
  %251 = vmatprep.subr.bf16.mxu0 0
  %252 = vmatpush1.bf16.msra.mxu0 0
  %253 = vmatprep.subr.bf16.mxu0 0
  %254 = vmatpush1.bf16.msra.mxu0 0
  %255 = vmatprep.subr.bf16.mxu0 0
  %256 = vmatpush1.bf16.msra.mxu0 0
  %257 = vmatprep.subr.bf16.mxu0 0
  %258 = vmatpush1.bf16.msra.mxu0 0
  %259 = vmatprep.mubr.bf16.mxu0 0
  %260 = vmatmul.mubr.bf16.gmra.mrb[0].mxu0 %v222
  %v261 = vpop.f32.mrb[0].mxu0
  %v262 = vadd.f32 0.0, %v261
  %v263 = vpop.f32.mrb[0].mxu0
  %v264 = vpop.f32.mrb[0].mxu0
  %v265 = vpop.f32.mrb[0].mxu0
  %266 = vdwg.mxu0
  %267 = vst [vmem:[%s4] sm:$0x7] %v262
  // Predicated region
  $region18: #{model_v0_forward.1} parent=0 // pred_check
    _
  $region19: #{model_v0_forward.1} parent=0 // pred_check_branch
    %269 = sbr.rel (0) target = $region21
  $region20: #{model_v0_forward.1} parent=0 // pred_region
    _
  $region21: #{model_v0_forward.1} parent=0 // pred_fallthru
    _
  // Predicated region
  $region22: #{model_v0_forward.1} parent=0 // pred_check
    _
  $region23: #{model_v0_forward.1} parent=0 // pred_check_branch
    %271 = sbr.rel (0) target = $region25
  $region24: #{model_v0_forward.1} parent=0 // pred_region
    _
  $region25: #{model_v0_forward.1} parent=0 // pred_fallthru
    _

</llo_original>
